<compile_context>
chip_gen: v6e
topology: v6e:2x2x1
jax: 0.10.0
libtpu: 0.0.40
codegen_flags: <defaults>
</compile_context>

<pallas_src>
import math

import numpy as np
import jax
import jax.numpy as jnp
from jax.experimental import pallas as pl
from jax.experimental.pallas import tpu as pltpu


# ---------------------------------------------------------------------------
# Hardware / budgeting helpers
# ---------------------------------------------------------------------------
def _tpu_vmem_capacity_bytes():
    """Physical VMEM per TensorCore; conservative 64 MiB (v7x) if unknown."""
    try:
        return int(pltpu.get_tpu_info().vmem_capacity_bytes)
    except Exception:
        return 64 << 20


def _vmem_limit_bytes(estimate_bytes):
    """Explicit scoped-VMEM limit: enough for the working set, capped below phys."""
    cap = _tpu_vmem_capacity_bytes()
    return int(min(int(cap * 0.9), max(int(estimate_bytes * 1.5), 32 << 20)))


def _round_up(x, m):
    return -(-x // m) * m


def _pick_block(dim, target, align=1):
    """Largest block <= target that divides `dim` and is a multiple of `align`.

    Falls back to the full extent (always layout-legal) only if no aligned
    divisor exists; never returns an unaligned partial block.
    """
    if dim <= target:
        return dim
    d = (target // align) * align
    while d >= align:
        if dim % d == 0:
            return d
        d -= align
    return dim  # TODO(synk): cdiv grid + masked tail blocks for pathological dims


# ---------------------------------------------------------------------------
# Tiled linear:  y = x @ W^T + b   (bias folded into the k==0 accumulator init)
# ---------------------------------------------------------------------------
def _linear_kernel(x_ref, w_ref, b_ref, o_ref, acc_ref):
    @pl.when(pl.program_id(2) == 0)
    def _():
        acc_ref[...] = jnp.broadcast_to(b_ref[...], acc_ref.shape).astype(jnp.float32)

    a = x_ref[...]
    w = w_ref[...]
    if a.dtype != w.dtype:          # cast activations to the MXU dtype in-kernel
        a = a.astype(w.dtype)       # (avoids a separate XLA cast pass over HBM)
    acc_ref[...] += jnp.dot(a, w, preferred_element_type=jnp.float32)

    @pl.when(pl.program_id(2) == pl.num_programs(2) - 1)
    def _():
        o_ref[...] = acc_ref[...].astype(o_ref.dtype)


def pallas_linear(x2d, wT, b, *, out_dtype=jnp.float32,
                  tm_target=512, tn_target=512, tk_target=512):
    """x2d: (M, K), wT: (K, N) (already transposed), b: (N,) -> (M, N) out_dtype."""
    M, K = x2d.shape
    Kw, N = wT.shape
    assert K == Kw

    tm = _pick_block(M, tm_target, 8)
    tn = _pick_block(N, tn_target, 128)
    tk = _pick_block(K, tk_target, 128)
    grid = (M // tm, N // tn, K // tk)

    ia = x2d.dtype.itemsize
    iw = wT.dtype.itemsize
    io = np.dtype(out_dtype).itemsize
    est = (2 * tm * tk * ia + 2 * tk * tn * iw + 2 * tn * 4
           + 2 * tm * tn * io + tm * tn * 4)
    cost = pl.CostEstimate(
        flops=int(2 * M * N * K),
        transcendentals=0,
        bytes_accessed=int(M * K * ia + (M // tm) * K * N * iw + M * N * io + N * 4))

    return pl.pallas_call(
        _linear_kernel,
        out_shape=jax.ShapeDtypeStruct((M, N), out_dtype),
        grid_spec=pltpu.PrefetchScalarGridSpec(
            num_scalar_prefetch=0,
            grid=grid,
            in_specs=[
                pl.BlockSpec((tm, tk), lambda i, j, k: (i, k)),
                pl.BlockSpec((tk, tn), lambda i, j, k: (k, j)),
                pl.BlockSpec((1, tn), lambda i, j, k: (0, j)),
            ],
            out_specs=pl.BlockSpec((tm, tn), lambda i, j, k: (i, j)),
            scratch_shapes=[pltpu.VMEM((tm, tn), jnp.float32)],
        ),
        compiler_params=pltpu.CompilerParams(
            dimension_semantics=("parallel", "parallel", "arbitrary"),
            vmem_limit_bytes=_vmem_limit_bytes(est)),
        cost_estimate=cost,
    )(x2d, wT, b.reshape(1, N).astype(jnp.float32))


# ---------------------------------------------------------------------------
# Windowed multi-head attention core (flash-style online softmax).
# q, k, v: (Nb, L, D) with Nb = windows (attention batch), L = seq, heads packed
# contiguously on the D (lane) axis.
# ---------------------------------------------------------------------------
def _make_attn_kernel(n_head, head_dim):
    def kernel(q_ref, k_ref, v_ref, o_ref, m_sc, l_sc, acc_sc):
        kvi = pl.program_id(2)

        @pl.when(kvi == 0)
        def _():
            m_sc[...] = jnp.full(m_sc.shape, -jnp.inf, m_sc.dtype)
            l_sc[...] = jnp.zeros(l_sc.shape, l_sc.dtype)
            acc_sc[...] = jnp.zeros(acc_sc.shape, acc_sc.dtype)

        q = q_ref[...]   # (nbb, tq,  D)  -- 1/sqrt(head_dim) folded into W_q
        k = k_ref[...]   # (nbb, tkv, D)
        v = v_ref[...]   # (nbb, tkv, D)

        # Static unroll over heads (n_head is small for this module).
        for h in range(n_head):
            lo = h * head_dim
            hi = lo + head_dim
            q_h = q[:, :, lo:hi]
            k_h = k[:, :, lo:hi]
            v_h = v[:, :, lo:hi]

            # No explicit k.T: contract last dims via a batched dot_general.
            s = jnp.einsum("bqd,bkd->bqk", q_h, k_h,
                           preferred_element_type=jnp.float32)   # (nbb, tq, tkv)

            m_prev = m_sc[h]                                     # (nbb, tq, 1)
            m_new = jnp.maximum(m_prev, jnp.max(s, axis=-1, keepdims=True))
            alpha = jnp.exp(m_prev - m_new)
            p = jnp.exp(s - m_new)
            l_sc[h] = alpha * l_sc[h] + jnp.sum(p, axis=-1, keepdims=True)
            # bf16 P for the P.V matmul when the kernel runs in bf16 mode.
            pv = jnp.einsum("bqk,bkd->bqd", p.astype(v_h.dtype), v_h,
                            preferred_element_type=jnp.float32)  # (nbb, tq, hd)
            acc_sc[h] = alpha * acc_sc[h] + pv
            m_sc[h] = m_new

        @pl.when(kvi == pl.num_programs(2) - 1)
        def _():
            # Normalize per head and emit one lane-dense (nbb, tq, D) store.
            outs = [acc_sc[h] * pl.reciprocal(l_sc[h], approx=True)
                    for h in range(n_head)]
            o_ref[...] = jnp.concatenate(outs, axis=-1).astype(o_ref.dtype)

    return kernel


def _attention_tiles(Nb, L, D, n_head, in_itemsize, out_itemsize,
                     nb_target, q_target, kv_target):
    """Pick attention tiles and derate them until they fit this chip's VMEM."""
    hd = D // n_head
    budget = int(_tpu_vmem_capacity_bytes() * 0.7)

    nbb = _pick_block(Nb, nb_target, 1)
    tq = _pick_block(L, q_target, 8)
    tkv = _pick_block(L, kv_target, 8)

    def est(nbb_, tq_, tkv_):
        q_b = 2 * nbb_ * tq_ * D * in_itemsize               # double-buffered q
        kv_b = 2 * 2 * nbb_ * tkv_ * D * in_itemsize         # double-buffered k + v
        o_b = 2 * nbb_ * tq_ * D * out_itemsize              # double-buffered out
        ml = 2 * n_head * nbb_ * tq_ * 128 * 4                # m/l (lane-padded)
        acc = n_head * nbb_ * tq_ * _round_up(hd, 128) * 4
        tmp = 3 * nbb_ * tq_ * tkv_ * 4                       # s/p temporaries
        return q_b + kv_b + o_b + ml + acc + tmp

    while est(nbb, tq, tkv) > budget:
        if tkv >= 256 and (tkv // 2) % 8 == 0 and L % (tkv // 2) == 0:
            tkv //= 2
        elif tq >= 256 and (tq // 2) % 8 == 0 and L % (tq // 2) == 0:
            tq //= 2
        elif nbb > 1:
            nbb = max(1, nbb // 2)
            while Nb % nbb:
                nbb -= 1
        else:
            break
    return nbb, tq, tkv, est(nbb, tq, tkv)


def pallas_local_attention(q, k, v, n_head, *, out_dtype=None,
                           nb_target=2, q_target=512, kv_target=512):
    """q, k, v: (Nb, L, D) -> attention output (Nb, L, D)."""
    Nb, L, D = q.shape
    hd = D // n_head
    if out_dtype is None:
        out_dtype = q.dtype

    nbb, tq, tkv, est = _attention_tiles(
        Nb, L, D, n_head, q.dtype.itemsize, np.dtype(out_dtype).itemsize,
        nb_target, q_target, kv_target)
    grid = (Nb // nbb, L // tq, L // tkv)   # kv axis MUST stay innermost/arbitrary

    q_spec = pl.BlockSpec((nbb, tq, D), lambda nb, qi, kvi: (nb, qi, 0))
    kv_spec = pl.BlockSpec((nbb, tkv, D), lambda nb, qi, kvi: (nb, kvi, 0))
    out_spec = pl.BlockSpec((nbb, tq, D), lambda nb, qi, kvi: (nb, qi, 0))

    isz = q.dtype.itemsize
    cost = pl.CostEstimate(
        flops=int(4 * Nb * L * L * D),
        transcendentals=int(Nb * n_head * L * L),
        bytes_accessed=int(Nb * L * D * isz                      # q (resident per qi)
                           + (L // tq) * Nb * L * 2 * D * isz    # k+v streamed per qi
                           + Nb * L * D * np.dtype(out_dtype).itemsize))

    return pl.pallas_call(
        _make_attn_kernel(n_head, hd),
        out_shape=jax.ShapeDtypeStruct((Nb, L, D), out_dtype),
        grid_spec=pltpu.PrefetchScalarGridSpec(
            num_scalar_prefetch=0,
            grid=grid,
            in_specs=[q_spec, kv_spec, kv_spec],
            out_specs=out_spec,
            scratch_shapes=[
                # (..., tq, 1) keeps tq on sublanes (no per-step lane relayout);
                # the 1 -> 128 lane padding is accounted for in the VMEM estimate.
                pltpu.VMEM((n_head, nbb, tq, 1), jnp.float32),    # running max m
                pltpu.VMEM((n_head, nbb, tq, 1), jnp.float32),    # running sum l
                pltpu.VMEM((n_head, nbb, tq, hd), jnp.float32),   # output accumulator
            ],
        ),
        compiler_params=pltpu.CompilerParams(
            dimension_semantics=("parallel", "parallel", "arbitrary"),
            vmem_limit_bytes=_vmem_limit_bytes(est)),
        cost_estimate=cost,
    )(q, k, v)


# ---------------------------------------------------------------------------
# Parameter prep (one-time): split fused in_proj, fold 1/sqrt(hd) into Q,
# pre-transpose, store weights in the MXU compute dtype.
# ---------------------------------------------------------------------------
def prepare_params(params, dim, n_head, *, use_bf16=True):
    hd = dim // n_head
    scale = 1.0 / math.sqrt(hd)
    wdt = jnp.bfloat16 if use_bf16 else jnp.float32

    w_in = params["in_proj_weight"]      # (3D, D), rows ordered [q | k | v]
    b_in = params["in_proj_bias"]        # (3D,)
    wq, wk, wv = w_in[:dim], w_in[dim:2 * dim], w_in[2 * dim:]
    bq, bk, bv = b_in[:dim], b_in[dim:2 * dim], b_in[2 * dim:]

    # TODO(synk): fp8 projection weights on v7x (accuracy-dependent).
    return {
        "wT_q": (wq * scale).T.astype(wdt),            # (D, D), scale folded in
        "wT_k": wk.T.astype(wdt),
        "wT_v": wv.T.astype(wdt),
        "b_q": (bq * scale).astype(jnp.float32),
        "b_k": bk.astype(jnp.float32),
        "b_v": bv.astype(jnp.float32),
        "wT_out": params["out_proj_weight"].T.astype(wdt),
        "b_out": params["out_proj_bias"].astype(jnp.float32),
    }


# ---------------------------------------------------------------------------
# Forward pass
# ---------------------------------------------------------------------------
def local_attention_forward(x, prepped, window_size, n_head):
    B, N, D = x.shape
    W = window_size
    assert N % W == 0, f"window_size={W} does not divide N={N} evenly!"
    G = N // W
    assert D % n_head == 0

    L = B * G   # attention sequence length (batch_first=False semantics)
    Nb = W      # attention "batch" = windows
    inter_dtype = prepped["wT_q"].dtype   # bf16 (default) or f32

    # 'b (g w) d -> w (b g) d'   (boundary relayout; heads stay packed on lanes)
    xr = x.reshape(B, G, W, D).transpose(2, 0, 1, 3).reshape(Nb * L, D)

    # Separate Q / K / V projections, emitted directly in the MXU dtype so the
    # attention kernel streams exactly the bytes it uses (no 3*D-wide blocks,
    # no extra XLA cast pass).
    q = pallas_linear(xr, prepped["wT_q"], prepped["b_q"], out_dtype=inter_dtype)
    k = pallas_linear(xr, prepped["wT_k"], prepped["b_k"], out_dtype=inter_dtype)
    v = pallas_linear(xr, prepped["wT_v"], prepped["b_v"], out_dtype=inter_dtype)

    attn = pallas_local_attention(q.reshape(Nb, L, D), k.reshape(Nb, L, D),
                                  v.reshape(Nb, L, D), n_head,
                                  out_dtype=inter_dtype)          # (Nb, L, D)

    out2d = pallas_linear(attn.reshape(Nb * L, D), prepped["wT_out"],
                          prepped["b_out"], out_dtype=jnp.float32)

    # 'w (b g) d -> b (g w) d'
    return out2d.reshape(W, B, G, D).transpose(1, 2, 0, 3).reshape(B, N, D)


# ---------------------------------------------------------------------------
# Pure-JAX reference (for correctness check only)
# ---------------------------------------------------------------------------
def reference_forward(x, params, window_size, n_head):
    B, N, D = x.shape
    W = window_size
    G = N // W
    H = n_head
    hd = D // H
    scale = 1.0 / math.sqrt(hd)
    hp = jax.lax.Precision.HIGHEST

    xr = x.reshape(B, G, W, D).reshape(B * G, W, D)
    L, Nb = B * G, W
    x2d = xr.reshape(L * Nb, D)
    qkv = jnp.dot(x2d, params["in_proj_weight"].T, precision=hp) + params["in_proj_bias"]
    q, k, v = jnp.split(qkv, 3, axis=-1)

    def to_heads(t):
        return jnp.transpose(t.reshape(L, Nb * H, hd), (1, 0, 2))

    qh, kh, vh = to_heads(q), to_heads(k), to_heads(v)
    s = jnp.einsum("bld,bmd->blm", qh * scale, kh, precision=hp)
    p = jax.nn.softmax(s, axis=-1)
    oh = jnp.einsum("blm,bmd->bld", p, vh, precision=hp)
    o2d = jnp.transpose(oh, (1, 0, 2)).reshape(L * Nb, D)
    out = jnp.dot(o2d, params["out_proj_weight"].T, precision=hp) + params["out_proj_bias"]
    return out.reshape(L, Nb, D).reshape(B, G, W, D).reshape(B, N, D)


# ---------------------------------------------------------------------------
if __name__ == "__main__":
    dim, window_size, n_head = 32, 2, 4   # nn.MultiheadAttention head_dim = dim // n_head
    B, N = 2, 8

    key = jax.random.PRNGKey(0)
    k1, k2, k3, k4, k5 = jax.random.split(key, 5)
    params = {
        "in_proj_weight": 0.05 * jax.random.normal(k1, (3 * dim, dim), jnp.float32),
        "in_proj_bias":   0.01 * jax.random.normal(k2, (3 * dim,), jnp.float32),
        "out_proj_weight": 0.05 * jax.random.normal(k3, (dim, dim), jnp.float32),
        "out_proj_bias":   0.01 * jax.random.normal(k4, (dim,), jnp.float32),
    }
    x = jax.random.normal(k5, (B, N, dim), jnp.float32)

    ref = reference_forward(x, params, window_size, n_head)

    # Default (optimized) path: bf16 MXU inputs, f32 accumulation, bf16 tensors
    # between the kernels.
    prepped = prepare_params(params, dim, n_head, use_bf16=True)
    out = jax.block_until_ready(local_attention_forward(x, prepped, window_size, n_head))
    assert out.shape == (B, N, dim)
    err_bf16 = float(jnp.max(jnp.abs(out - ref)))
    assert jnp.allclose(out, ref, atol=3e-2, rtol=3e-2), f"bf16 path max_err={err_bf16}"

    # Full-f32 path: tight numerical check of the kernel structure itself.
    prepped32 = prepare_params(params, dim, n_head, use_bf16=False)
    out32 = jax.block_until_ready(local_attention_forward(x, prepped32, window_size, n_head))
    err_f32 = float(jnp.max(jnp.abs(out32 - ref)))
    assert jnp.allclose(out32, ref, atol=5e-3, rtol=5e-3), f"f32 path max_err={err_f32}"

    print("KERNEL_OK")
</pallas_src>

<mosaic_0001>
module attributes {stable_mosaic.version = 11 : i64} {
  func.func @_linear_kernel(%arg0: i32, %arg1: i32, %arg2: i32, %arg3: memref<16x32xf32, #tpu.memory_space<vmem>>, %arg4: memref<32x32xbf16, #tpu.memory_space<vmem>>, %arg5: memref<1x32xf32, #tpu.memory_space<vmem>>, %arg6: memref<16x32xbf16, #tpu.memory_space<vmem>>, %arg7: memref<16x32xf32, #tpu.memory_space<vmem>>) attributes {dimension_semantics = [#tpu.dimension_semantics<parallel>, #tpu.dimension_semantics<parallel>, #tpu.dimension_semantics<arbitrary>], iteration_bounds = array<i64: 1, 1, 1>, scalar_prefetch = 0 : i64, scratch_operands = 1 : i64, tpu.core_type = #tpu.core_type<tc>, window_params = [{transform_indices = @transform_0, window_bounds = array<i64: 16, 32>}, {transform_indices = @transform_1, window_bounds = array<i64: 32, 32>}, {transform_indices = @transform_2, window_bounds = array<i64: 1, 32>}, {transform_indices = @transform_3, window_bounds = array<i64: 16, 32>}]} {
    %c0_i32 = arith.constant 0 : i32
    %0 = arith.cmpi eq, %arg2, %c0_i32 : i32
    %1 = arith.extui %0 : i1 to i32
    %c0_i32_0 = arith.constant 0 : i32
    %2 = arith.cmpi ne, %1, %c0_i32_0 : i32
    scf.if %2 {
      %c0_10 = arith.constant 0 : index
      %c0_11 = arith.constant 0 : index
      %13 = vector.load %arg5[%c0_10, %c0_11] : memref<1x32xf32, #tpu.memory_space<vmem>>, vector<1x32xf32>
      %14 = vector.shape_cast %13 : vector<1x32xf32> to vector<1x32xf32>
      %15 = vector.broadcast %14 : vector<1x32xf32> to vector<16x32xf32>
      %c0_12 = arith.constant 0 : index
      %c0_13 = arith.constant 0 : index
      %16 = vector.load %arg7[%c0_12, %c0_13] : memref<16x32xf32, #tpu.memory_space<vmem>>, vector<16x32xf32>
      tpu.vector_store %arg7[%c0_12, %c0_13], %15 {strides = array<i32>} : memref<16x32xf32, #tpu.memory_space<vmem>>, vector<16x32xf32>,
    } else {
    }
    %c0 = arith.constant 0 : index
    %c0_1 = arith.constant 0 : index
    %3 = vector.load %arg3[%c0, %c0_1] : memref<16x32xf32, #tpu.memory_space<vmem>>, vector<16x32xf32>
    %c0_2 = arith.constant 0 : index
    %c0_3 = arith.constant 0 : index
    %4 = vector.load %arg4[%c0_2, %c0_3] : memref<32x32xbf16, #tpu.memory_space<vmem>>, vector<32x32xbf16>
    %5 = arith.truncf %3 : vector<16x32xf32> to vector<16x32xbf16>
    %c0_4 = arith.constant 0 : index
    %c0_5 = arith.constant 0 : index
    %6 = vector.load %arg7[%c0_4, %c0_5] : memref<16x32xf32, #tpu.memory_space<vmem>>, vector<16x32xf32>
    %cst = arith.constant dense<0.000000e+00> : vector<16x32xf32>
    %7 = tpu.matmul %5, %4, %cst {dimension_numbers = #tpu.dot_dimension_numbers<[1], [0], [0], [1], [0, 0, 1, 1], [], []>} : vector<16x32xbf16>, vector<32x32xbf16>, vector<16x32xf32> -> vector<16x32xf32>
    %8 = arith.addf %6, %7 : vector<16x32xf32>
    %c0_6 = arith.constant 0 : index
    %c0_7 = arith.constant 0 : index
    %9 = vector.load %arg7[%c0_6, %c0_7] : memref<16x32xf32, #tpu.memory_space<vmem>>, vector<16x32xf32>
    tpu.vector_store %arg7[%c0_6, %c0_7], %8 {strides = array<i32>} : memref<16x32xf32, #tpu.memory_space<vmem>>, vector<16x32xf32>,
    %c0_i32_8 = arith.constant 0 : i32
    %10 = arith.cmpi eq, %arg2, %c0_i32_8 : i32
    %11 = arith.extui %10 : i1 to i32
    %c0_i32_9 = arith.constant 0 : i32
    %12 = arith.cmpi ne, %11, %c0_i32_9 : i32
    scf.if %12 {
      %c0_10 = arith.constant 0 : index
      %c0_11 = arith.constant 0 : index
      %13 = vector.load %arg7[%c0_10, %c0_11] : memref<16x32xf32, #tpu.memory_space<vmem>>, vector<16x32xf32>
      %14 = arith.truncf %13 : vector<16x32xf32> to vector<16x32xbf16>
      %c0_12 = arith.constant 0 : index
      %c0_13 = arith.constant 0 : index
      %15 = vector.load %arg6[%c0_12, %c0_13] : memref<16x32xbf16, #tpu.memory_space<vmem>>, vector<16x32xbf16>
      tpu.vector_store %arg6[%c0_12, %c0_13], %14 {strides = array<i32>} : memref<16x32xbf16, #tpu.memory_space<vmem>>, vector<16x32xbf16>,
    } else {
    }
    return
  }
  func.func @transform_0(%arg0: i32, %arg1: i32, %arg2: i32) -> (i32, i32) {
    %c0_i32 = arith.constant 0 : i32
    return %arg0, %arg2 : i32, i32
  }
  func.func @transform_1(%arg0: i32, %arg1: i32, %arg2: i32) -> (i32, i32) {
    %c0_i32 = arith.constant 0 : i32
    return %arg2, %arg1 : i32, i32
  }
  func.func @transform_2(%arg0: i32, %arg1: i32, %arg2: i32) -> (i32, i32) {
    %c0_i32 = arith.constant 0 : i32
    %c0_i32_0 = arith.constant 0 : i32
    return %c0_i32, %arg1 : i32, i32
  }
  func.func @transform_3(%arg0: i32, %arg1: i32, %arg2: i32) -> (i32, i32) {
    %c0_i32 = arith.constant 0 : i32
    return %arg0, %arg1 : i32, i32
  }
}

</mosaic_0001>

<llo_original>
// kernel: tpu_custom_call.1
$region0: #{tpu_custom_call.1}
  #allocation0 [shape = 'u32[]', space=smem, size = 0x4, offset = 0x4, fixed_abs, tag = 'smem constant byte address 0x4 - core index']
  #allocation1 [shape = 'u32[144,128]{1,0:T(1,128)}', space=vmem, size = 0x12000, scoped, tag = 'internal scratch']
  #allocation2 [shape = 'f32[16,32]{1,0:T(8,128)}', space=vmem, size = 0x2000, scoped, tag = 'scratch operand']
  %s0 = inlined_call_operand.hbm [shape: f32[16,32], index: 0, kind: input, shape index: {}]
  %s1 = inlined_call_operand.hbm [shape: bf16[32,32], index: 1, kind: input, shape index: {}]
  %s2 = inlined_call_operand.vmem [shape: f32[1,32], index: 2, kind: input, shape index: {}]
  %s3 = inlined_call_operand.hbm [shape: bf16[16,32], index: 3, kind: output, shape index: {}]
  %s4 = sld [smem:[#allocation0]]
  $region38: #{tpu_custom_call.1} parent=0
    _
  %s6 = ssub.s32 1, %s4
  %s7 = scalar_select 0, %s6, %s4
  $region1: #{tpu_custom_call.1} parent=0
    #allocation3 [shape = 'u8[8192]{0}', space=vmem, size = 0x2000, scoped, tag = 'input window, operand 0, single buffered']
    #allocation4 [shape = 's32[1]{0}', space=sflag, size = 0x4, scoped, tag = 'scoped memory for tpu_custom_call.1']
    #allocation5 [shape = 's32[1]{0}', space=sflag, size = 0x4, scoped, tag = 'scoped memory for tpu_custom_call.1']
    #allocation6 [shape = 'u8[8192]{0}', space=vmem, size = 0x2000, scoped, tag = 'input window, operand 1, single buffered']
    #allocation7 [shape = 's32[1]{0}', space=sflag, size = 0x4, scoped, tag = 'scoped memory for tpu_custom_call.1']
    #allocation8 [shape = 'u8[4096]{0}', space=vmem, size = 0x1000, scoped, tag = 'output window, operand 0, single buffered']
    %8 = vsyncpa [#allocation4], 0
    %9 = vsyncpa [#allocation7], 0
    %10 = vsyncpa [#allocation5], 0
    // Predicated region
    $region2: #{tpu_custom_call.1} parent=1 // pred_check
      _
    $region3: #{tpu_custom_call.1} parent=1 // pred_check_branch
      %12 = sbr.rel (0) target = $region5
    $region4: #{tpu_custom_call.1} parent=1 // pred_region
      %s14 = ssub.s32 256, 256
      %15 = vsyncadd [#allocation4], %s14
      %s16 = sshll.u32 [#allocation3], 4
      %s17 = int_to_ptr.vmem [resolvable:$true] %s16
      %22 = dma.hbm_to_vmem [thread:$0]  %s0, 256, %s17, [#allocation4], 128, 128, 8
    $region5: #{tpu_custom_call.1} parent=1 // pred_fallthru
      _
    // Predicated region
    $region6: #{tpu_custom_call.1} parent=1 // pred_check
      _
    $region7: #{tpu_custom_call.1} parent=1 // pred_check_branch
      %24 = sbr.rel (0) target = $region9
    $region8: #{tpu_custom_call.1} parent=1 // pred_region
      %s26 = ssub.s32 256, 256
      %27 = vsyncadd [#allocation7], %s26
      %s28 = sshll.u32 [#allocation6], 4
      %s29 = int_to_ptr.vmem [resolvable:$true] %s28
      %34 = dma.hbm_to_vmem [thread:$0]  %s1, 256, %s29, [#allocation7], 64, 64, 4
    $region9: #{tpu_custom_call.1} parent=1 // pred_fallthru
      _
    // Predicated region
    $region10: #{tpu_custom_call.1} parent=1 // pred_check
      _
    $region11: #{tpu_custom_call.1} parent=1 // pred_check_branch
      %36 = sbr.rel (0) target = $region13
    $region12: #{tpu_custom_call.1} parent=1 // pred_region
      _
    $region13: #{tpu_custom_call.1} parent=1 // pred_fallthru
      _
    // Predicated region
    $region14: #{tpu_custom_call.1} parent=1 // pred_check
      _
    $region15: #{tpu_custom_call.1} parent=1 // pred_check_branch
      %38 = sbr.rel (0) target = $region17
    $region16: #{tpu_custom_call.1} parent=1 // pred_region
      %39 = dma.done [#allocation4], 256
    $region17: #{tpu_custom_call.1} parent=1 // pred_fallthru
      _
    // Predicated region
    $region18: #{tpu_custom_call.1} parent=1 // pred_check
      _
    $region19: #{tpu_custom_call.1} parent=1 // pred_check_branch
      %41 = sbr.rel (0) target = $region21
    $region20: #{tpu_custom_call.1} parent=1 // pred_region
      %42 = dma.done [#allocation7], 256
    $region21: #{tpu_custom_call.1} parent=1 // pred_fallthru
      _
    %p44 = scmp.eq.s32.totalorder 0, 0
    // Predicated region
    $region22: #{tpu_custom_call.1} parent=1 // pred_check
      %p45 = pneg %p44
    $region23: #{tpu_custom_call.1} parent=1 // pred_check_branch
      %47 = sbr.rel (%p45) target = $region25
    $region24: #{tpu_custom_call.1} parent=1 // pred_region
      %v48 = vld [vmem:[%s2] sm:$0x1]
      %v50 = vlaneseq
      %v51 = vshrl.u32 %v50, 7
      %v52 = vsub.s32 0, %v51
      %v53 = vrot.slane %v48, %v52
      %vm55 = vcmask 261120
      %56 = vst.msk [vmem:[#allocation2] sm:$0xff] %vm55, %v53
      %57 = vst.msk [vmem:[#allocation2 + $0x8] sm:$0xff] %vm55, %v53
    $region25: #{tpu_custom_call.1} parent=1 // pred_fallthru
      _
    %v58 = vld [vmem:[#allocation3] sm:$0xff]
    %v59 = vld [vmem:[#allocation3 + $0x8] sm:$0xff]
    %v60 = vld [vmem:[#allocation6] sm:$0xf]
    %v61 = vld [vmem:[#allocation6 + $0x4] sm:$0xf]
    %v62 = vld [vmem:[#allocation6 + $0x8] sm:$0xf]
    %v63 = vld [vmem:[#allocation6 + $0xc] sm:$0xf]
    %v64 = vpack.c.bf16 %v59, %v58
    %v65 = vld [vmem:[#allocation2] sm:$0xff]
    %v66 = vld [vmem:[#allocation2 + $0x8] sm:$0xff]
    %v71 = vunpack.c.l.b16 %v60
    %v72 = vunpack.c.l.b16 %v61
    %v73 = vunpack.c.l.b16 %v62
    %v74 = vunpack.c.l.b16 %v63
    %v75 = vpack.c.b16 %v72, %v71
    %v76 = vpack.c.b16 %v74, %v73
    %vm79 = vcmask 261120
    %v81 = vsel %vm79, %v64, 0
    %83 = vmatprep.subr.bf16.mxu0 0
    %84 = vmatpush1.bf16.msra.mxu0 0
    %85 = vmatprep.subr.bf16.mxu0 0
    %86 = vmatpush1.bf16.msra.mxu0 0
    %87 = vmatprep.subr.bf16.mxu0 0
    %88 = vmatpush1.bf16.msra.mxu0 0
    %89 = vmatprep.subr.bf16.mxu0 0
    %90 = vmatpush1.bf16.msra.mxu0 0
    %91 = vmatprep.subr.bf16.mxu0 0
    %92 = vmatpush1.bf16.msra.mxu0 0
    %93 = vmatprep.subr.bf16.mxu0 0
    %94 = vmatpush1.bf16.msra.mxu0 0
    %95 = vmatprep.subr.bf16.mxu0 0
    %96 = vmatpush1.bf16.msra.mxu0 %v76
    %97 = vmatprep.subr.bf16.mxu0 0
    %98 = vmatpush1.bf16.msra.mxu0 %v75
    %99 = vmatprep.subr.bf16.mxu0 0
    %100 = vmatpush2.bf16.msra.mxu0 0
    %101 = vmatprep.subr.bf16.mxu0 0
    %102 = vmatpush2.bf16.msra.mxu0 0
    %103 = vmatprep.subr.bf16.mxu0 0
    %104 = vmatpush2.bf16.msra.mxu0 0
    %105 = vmatprep.subr.bf16.mxu0 0
    %106 = vmatpush2.bf16.msra.mxu0 0
    %107 = vmatprep.subr.bf16.mxu0 0
    %108 = vmatpush2.bf16.msra.mxu0 0
    %109 = vmatprep.subr.bf16.mxu0 0
    %110 = vmatpush2.bf16.msra.mxu0 0
    %111 = vmatprep.subr.bf16.mxu0 0
    %112 = vmatpush2.bf16.msra.mxu0 0
    %113 = vmatprep.subr.bf16.mxu0 0
    %114 = vmatpush2.bf16.msra.mxu0 0
    %115 = vmatprep.mubr.bf16.mxu0 0
    %116 = vmatmul.mubr.bf16.gmra.mxu0 %v81
    %v117 = vpop.f32.mrf.mxu0
    %v118 = vadd.f32 0.0, %v117
    %v119 = vpop.f32.mrf.mxu0
    %v120 = vpop.f32.mrf.mxu0
    %v121 = vadd.f32 0.0, %v120
    %v122 = vpop.f32.mrf.mxu0
    %123 = vdwg.mxu0
    %v124 = vadd.f32 %v65, %v118
    %v125 = vadd.f32 %v66, %v121
    %126 = vst.msk [vmem:[#allocation2] sm:$0xff] %vm79, %v124
    %127 = vst.msk [vmem:[#allocation2 + $0x8] sm:$0xff] %vm79, %v125
    // Predicated region
    $region26: #{tpu_custom_call.1} parent=1 // pred_check
      %p128 = pneg %p44
    $region27: #{tpu_custom_call.1} parent=1 // pred_check_branch
      %130 = sbr.rel (%p128) target = $region29
    $region28: #{tpu_custom_call.1} parent=1 // pred_region
      %v131 = vld [vmem:[#allocation2] sm:$0xff]
      %v132 = vld [vmem:[#allocation2 + $0x8] sm:$0xff]
      %v133 = vpack.c.bf16 %v132, %v131
      %v135 = vunpack.c.l.b16 %v133
      %v136 = vunpack.c.h.b16 %v133
      %v137 = vpack.c.b16 %v135, %v135
      %v138 = vpack.c.b16 %v136, %v136
      %vm141 = vcmask 257024
      %142 = vst.msk [vmem:[#allocation8] sm:$0xf] %vm141, %v137
      %143 = vst.msk [vmem:[#allocation8 + $0x4] sm:$0xf] %vm141, %v138
    $region29: #{tpu_custom_call.1} parent=1 // pred_fallthru
      _
    // Predicated region
    $region30: #{tpu_custom_call.1} parent=1 // pred_check
      _
    $region31: #{tpu_custom_call.1} parent=1 // pred_check_branch
      %145 = sbr.rel (0) target = $region33
    $region32: #{tpu_custom_call.1} parent=1 // pred_region
      %s147 = ssub.s32 128, 128
      %148 = vsyncadd [#allocation5], %s147
      %s149 = sshll.u32 [#allocation8], 4
      %s150 = int_to_ptr.vmem [resolvable:$true] %s149
      %155 = dma.vmem_to_hbm [thread:$0]  %s150, 128, %s3, [#allocation5], 64, 64, 4
    $region33: #{tpu_custom_call.1} parent=1 // pred_fallthru
      _
    // Predicated region
    $region34: #{tpu_custom_call.1} parent=1 // pred_check
      _
    $region35: #{tpu_custom_call.1} parent=1 // pred_check_branch
      %157 = sbr.rel (0) target = $region37
    $region36: #{tpu_custom_call.1} parent=1 // pred_region
      %158 = dma.done [#allocation5], 128
    $region37: #{tpu_custom_call.1} parent=1 // pred_fallthru
      _
    %159 = vsyncpa [#allocation4], 1
    %160 = vsyncpa [#allocation7], 1
    %161 = vsyncpa [#allocation5], 1

</llo_original>
